<compile_context>
chip_gen: v6e
topology: v6e:2x2x1
jax: 0.10.0
libtpu: 0.0.40
codegen_flags: <defaults>
</compile_context>

<pallas_src>
import functools

import jax
import jax.numpy as jnp
from jax.experimental import pallas as pl
from jax.experimental.pallas import tpu as pltpu


def _weighted_l2_kernel(pred_ref, targ_ref, w_ref, a0s_ref, out_ref,
                        *, batch, block_rows, inv_n_w, inv_n_a0, need_row_mask):
    # pred_ref/targ_ref : [bt, HT] (input dtype)
    # w_ref/a0s_ref     : [1, HT]  f32
    # out_ref           : [1, 1, 128] f32  (lane 0 = weighted partial mean,
    #                                       lane 1 = a0 partial mean)
    pred = pred_ref[...].astype(jnp.float32)
    targ = targ_ref[...].astype(jnp.float32)
    diff = pred - targ
    loss = diff * diff                               # WeightedL2: (pred-targ)^2

    if need_row_mask:
        # Last grid block may extend past B: stale VMEM rows MUST be zeroed
        # before either reduction (edge blocks expose garbage, not zeros).
        row = (jax.lax.broadcasted_iota(jnp.int32, (block_rows, 1), 0)
               + pl.program_id(0) * block_rows)
        loss = jnp.where(row < batch, loss, jnp.float32(0.0))

    w = w_ref[...]                                   # broadcast over batch rows
    a0s = a0s_ref[...]                               # 1/weights[0,:A] on lanes < A, else 0

    # Per-block contributions to the final MEANS (divide by true counts here so
    # the single-block case needs no JAX-side reduction at all).
    wmean = jnp.sum(loss * w) * jnp.float32(inv_n_w)
    a0mean = jnp.sum(loss * a0s) * jnp.float32(inv_n_a0)

    lane = jax.lax.broadcasted_iota(jnp.int32, out_ref.shape, 2)
    out_ref[...] = jnp.where(lane == 0, wmean,
                             jnp.where(lane == 1, a0mean, jnp.float32(0.0)))


def weighted_l2_loss(pred, targ, weights, action_dim):
    """Returns (weighted_loss, {'a0_loss': a0_loss}) matching the PyTorch module."""
    B, H, T = pred.shape
    assert targ.shape == (B, H, T)
    assert weights.shape == (H, T)
    assert 0 < action_dim <= T

    HT = H * T

    # ---- lane-dense flatten: element (b,h,t) -> lane h*T+t (free reshape, no pad) ----
    pred2 = pred.reshape(B, HT)
    targ2 = targ.reshape(B, HT)

    w_flat = weights.reshape(HT).astype(jnp.float32)
    lane = jnp.arange(HT)
    a0_mask = lane < action_dim                      # h=0, t<A  ->  lane < A after flatten
    safe_w = jnp.where(a0_mask, w_flat, jnp.float32(1.0))        # mask BEFORE dividing
    a0_flat = jnp.where(a0_mask, 1.0 / safe_w, jnp.float32(0.0))  # exact reciprocal
    w2 = w_flat.reshape(1, HT)
    a0s2 = a0_flat.reshape(1, HT)

    itemsize = pred2.dtype.itemsize

    # ---- batch tiling: ~3 MiB of f32 per block, rows a multiple of 8 ----
    f32_row_bytes = HT * 4
    rows = max(8, (3 << 20) // f32_row_bytes)
    bt = max(8, (rows // 8) * 8)
    bt = min(bt, ((B + 7) // 8) * 8)
    # Force >= 2 parallel blocks for non-tiny inputs so both v7x TCs stream HBM.
    total_in_bytes = B * HT * itemsize
    if total_in_bytes > (2 << 20) and B >= 16:
        half = ((-(-B // 2)) + 7) // 8 * 8           # round_up(ceil(B/2), 8)
        bt = min(bt, half)
    if B < 8:
        bt = B                                       # block == full batch dim
    num_blocks = pl.cdiv(B, bt)
    need_row_mask = (num_blocks * bt != B)           # tail rows exist -> mask in-kernel

    kernel = functools.partial(
        _weighted_l2_kernel,
        batch=B,
        block_rows=bt,
        inv_n_w=float(1.0 / (B * H * T)),
        inv_n_a0=float(1.0 / (B * action_dim)),
        need_row_mask=need_row_mask,
    )

    # VMEM budget: inputs double-buffered + f32 temporaries + weights + outputs + slack.
    vmem_est = (4 * bt * HT * itemsize               # pred/targ x 2 pipeline buffers
                + 4 * bt * HT * 4                    # f32 temporaries headroom
                + 2 * 2 * HT * 4                     # w / a0 recip, double-buffered
                + 2 * 2 * 128 * 4                    # output tiles
                + (2 << 20))                         # slack
    vmem_limit = int(min(max(vmem_est, 16 << 20), 32 << 20))  # fits v7x 64 MiB/TC

    out = pl.pallas_call(
        kernel,
        out_shape=jax.ShapeDtypeStruct((num_blocks, 1, 128), jnp.float32),
        grid=(num_blocks,),
        in_specs=[
            pl.BlockSpec((bt, HT), lambda i: (i, 0)),
            pl.BlockSpec((bt, HT), lambda i: (i, 0)),
            pl.BlockSpec((1, HT), lambda i: (0, 0)),
            pl.BlockSpec((1, HT), lambda i: (0, 0)),
        ],
        out_specs=pl.BlockSpec((1, 1, 128), lambda i: (i, 0, 0)),
        compiler_params=pltpu.CompilerParams(
            dimension_semantics=("parallel",),
            vmem_limit_bytes=vmem_limit,
        ),
    )(pred2, targ2, w2, a0s2)

    if num_blocks == 1:
        # Fast path: per-block partials are already full means; just read lanes.
        weighted_loss = out[0, 0, 0]
        a0_loss = out[0, 0, 1]
    else:
        totals = jnp.sum(out[:, 0, :2], axis=0)
        weighted_loss = totals[0]
        a0_loss = totals[1]
    return weighted_loss, {'a0_loss': a0_loss}


def _reference(pred, targ, weights, action_dim):
    loss = (pred.astype(jnp.float32) - targ.astype(jnp.float32)) ** 2
    weighted_loss = jnp.mean(loss * weights[None, :, :].astype(jnp.float32))
    a0_loss = jnp.mean(loss[:, 0, :action_dim] / weights[0, :action_dim].astype(jnp.float32))
    return weighted_loss, a0_loss


def _check(key, B, H, T, action_dim, dtype=jnp.float32, tol=1e-5):
    k1, k2 = jax.random.split(key)
    pred = jax.random.normal(k1, (B, H, T), dtype=jnp.float32).astype(dtype)
    targ = jax.random.normal(k2, (B, H, T), dtype=jnp.float32).astype(dtype)
    discounts = 0.99 ** jnp.arange(H, dtype=jnp.float32)            # [H]
    weights = jnp.broadcast_to(discounts[:, None], (H, T)) + 0.1    # [H, T], > 0

    wloss, info = weighted_l2_loss(pred, targ, weights, action_dim)
    wloss = jax.block_until_ready(wloss)
    a0 = jax.block_until_ready(info['a0_loss'])

    ref_wloss, ref_a0 = _reference(pred, targ, weights, action_dim)
    assert jnp.allclose(wloss, ref_wloss, rtol=tol, atol=tol), (wloss, ref_wloss)
    assert jnp.allclose(a0, ref_a0, rtol=tol, atol=tol), (a0, ref_a0)


if __name__ == "__main__":
    key = jax.random.PRNGKey(0)
    ka, kb, kc = jax.random.split(key, 3)
    # Small shapes consistent with diffuser: [batch x horizon x transition_dim]
    _check(ka, B=2, H=8, T=32, action_dim=4)     # H*T lane-aligned (256), tiny batch
    _check(kb, B=3, H=5, T=20, action_dim=6)     # non-128-aligned lanes, B < 8
    _check(kc, B=37, H=4, T=24, action_dim=8)    # exercises in-kernel tail-row mask
    print("KERNEL_OK")
</pallas_src>

<mosaic_0001>
module attributes {stable_mosaic.version = 11 : i64} {
  func.func @_weighted_l2_kernel(%arg0: i32, %arg1: memref<2x256xf32, #tpu.memory_space<vmem>>, %arg2: memref<2x256xf32, #tpu.memory_space<vmem>>, %arg3: memref<1x256xf32, #tpu.memory_space<vmem>>, %arg4: memref<1x256xf32, #tpu.memory_space<vmem>>, %arg5: memref<1x1x128xf32, #tpu.memory_space<vmem>>) attributes {dimension_semantics = [#tpu.dimension_semantics<parallel>], iteration_bounds = array<i64: 1>, scalar_prefetch = 0 : i64, scratch_operands = 0 : i64, tpu.core_type = #tpu.core_type<tc>, window_params = [{transform_indices = @transform_0, window_bounds = array<i64: 2, 256>}, {transform_indices = @transform_1, window_bounds = array<i64: 2, 256>}, {pipeline_mode = #tpu.pipeline_mode<synchronous>, transform_indices = @transform_2, window_bounds = array<i64: 1, 256>}, {pipeline_mode = #tpu.pipeline_mode<synchronous>, transform_indices = @transform_3, window_bounds = array<i64: 1, 256>}, {transform_indices = @transform_4, window_bounds = array<i64: 1, 1, 128>}]} {
    %c0 = arith.constant 0 : index
    %c0_0 = arith.constant 0 : index
    %0 = vector.load %arg1[%c0, %c0_0] : memref<2x256xf32, #tpu.memory_space<vmem>>, vector<2x256xf32>
    %c0_1 = arith.constant 0 : index
    %c0_2 = arith.constant 0 : index
    %1 = vector.load %arg2[%c0_1, %c0_2] : memref<2x256xf32, #tpu.memory_space<vmem>>, vector<2x256xf32>
    %2 = arith.subf %0, %1 : vector<2x256xf32>
    %3 = arith.mulf %2, %2 : vector<2x256xf32>
    %c0_3 = arith.constant 0 : index
    %c0_4 = arith.constant 0 : index
    %4 = vector.load %arg3[%c0_3, %c0_4] : memref<1x256xf32, #tpu.memory_space<vmem>>, vector<1x256xf32>
    %c0_5 = arith.constant 0 : index
    %c0_6 = arith.constant 0 : index
    %5 = vector.load %arg4[%c0_5, %c0_6] : memref<1x256xf32, #tpu.memory_space<vmem>>, vector<1x256xf32>
    %6 = vector.broadcast %4 : vector<1x256xf32> to vector<2x256xf32>
    %7 = arith.mulf %3, %6 : vector<2x256xf32>
    %8 = vector.shape_cast %7 : vector<2x256xf32> to vector<1x2x256xf32>
    %cst = arith.constant dense<0.000000e+00> : vector<1xf32>
    %9 = vector.multi_reduction <add>, %8, %cst [1, 2] : vector<1x2x256xf32> to vector<1xf32>
    %10 = vector.shape_cast %9 : vector<1xf32> to vector<1x1x1xf32>
    %11 = vector.extract %10[0, 0, 0] : f32 from vector<1x1x1xf32>
    %cst_7 = arith.constant 0.001953125 : f32
    %12 = arith.mulf %11, %cst_7 : f32
    %13 = vector.broadcast %5 : vector<1x256xf32> to vector<2x256xf32>
    %14 = arith.mulf %3, %13 : vector<2x256xf32>
    %15 = vector.shape_cast %14 : vector<2x256xf32> to vector<1x2x256xf32>
    %cst_8 = arith.constant dense<0.000000e+00> : vector<1xf32>
    %16 = vector.multi_reduction <add>, %15, %cst_8 [1, 2] : vector<1x2x256xf32> to vector<1xf32>
    %17 = vector.shape_cast %16 : vector<1xf32> to vector<1x1x1xf32>
    %18 = vector.extract %17[0, 0, 0] : f32 from vector<1x1x1xf32>
    %cst_9 = arith.constant 1.250000e-01 : f32
    %19 = arith.mulf %18, %cst_9 : f32
    %20 = tpu.iota {dimensions = array<i32: 2>} : vector<1x1x128xi32>
    %c0_i32 = arith.constant 0 : i32
    %21 = vector.broadcast %c0_i32 : i32 to vector<1x1x128xi32>
    %22 = arith.cmpi eq, %20, %21 : vector<1x1x128xi32>
    %c1_i32 = arith.constant 1 : i32
    %23 = vector.broadcast %c1_i32 : i32 to vector<1x1x128xi32>
    %24 = arith.cmpi eq, %20, %23 : vector<1x1x128xi32>
    %cst_10 = arith.constant 0.000000e+00 : f32
    %25 = vector.broadcast %19 : f32 to vector<1x1x128xf32>
    %26 = vector.broadcast %cst_10 : f32 to vector<1x1x128xf32>
    %27 = arith.select %24, %25, %26 : vector<1x1x128xi1>, vector<1x1x128xf32>
    %28 = vector.broadcast %12 : f32 to vector<1x1x128xf32>
    %29 = arith.select %22, %28, %27 : vector<1x1x128xi1>, vector<1x1x128xf32>
    %c0_11 = arith.constant 0 : index
    %c0_12 = arith.constant 0 : index
    %c0_13 = arith.constant 0 : index
    %30 = vector.load %arg5[%c0_11, %c0_12, %c0_13] : memref<1x1x128xf32, #tpu.memory_space<vmem>>, vector<1x1x128xf32>
    tpu.vector_store %arg5[%c0_11, %c0_12, %c0_13], %29 {strides = array<i32>} : memref<1x1x128xf32, #tpu.memory_space<vmem>>, vector<1x1x128xf32>,
    return
  }
  func.func @transform_0(%arg0: i32) -> (i32, i32) {
    %c0_i32 = arith.constant 0 : i32
    %c0_i32_0 = arith.constant 0 : i32
    return %arg0, %c0_i32 : i32, i32
  }
  func.func @transform_1(%arg0: i32) -> (i32, i32) {
    %c0_i32 = arith.constant 0 : i32
    %c0_i32_0 = arith.constant 0 : i32
    return %arg0, %c0_i32 : i32, i32
  }
  func.func @transform_2(%arg0: i32) -> (i32, i32) {
    %c0_i32 = arith.constant 0 : i32
    %c0_i32_0 = arith.constant 0 : i32
    %c0_i32_1 = arith.constant 0 : i32
    return %c0_i32, %c0_i32_0 : i32, i32
  }
  func.func @transform_3(%arg0: i32) -> (i32, i32) {
    %c0_i32 = arith.constant 0 : i32
    %c0_i32_0 = arith.constant 0 : i32
    %c0_i32_1 = arith.constant 0 : i32
    return %c0_i32, %c0_i32_0 : i32, i32
  }
  func.func @transform_4(%arg0: i32) -> (i32, i32, i32) {
    %c0_i32 = arith.constant 0 : i32
    %c0_i32_0 = arith.constant 0 : i32
    %c0_i32_1 = arith.constant 0 : i32
    return %arg0, %c0_i32, %c0_i32_0 : i32, i32, i32
  }
}

</mosaic_0001>

<llo_original>
// kernel: tpu_custom_call.1
$region0: #{tpu_custom_call.1}
  #allocation0 [shape = 'u32[]', space=smem, size = 0x4, offset = 0x4, fixed_abs, tag = 'smem constant byte address 0x4 - core index']
  #allocation1 [shape = 'u32[144,128]{1,0:T(1,128)}', space=vmem, size = 0x12000, scoped, tag = 'internal scratch']
  %s0 = inlined_call_operand.hbm [shape: f32[2,256], index: 0, kind: input, shape index: {}]
  %s1 = inlined_call_operand.hbm [shape: f32[2,256], index: 1, kind: input, shape index: {}]
  %s2 = inlined_call_operand.vmem [shape: f32[1,256], index: 2, kind: input, shape index: {}]
  %s3 = inlined_call_operand.vmem [shape: f32[1,256], index: 3, kind: input, shape index: {}]
  %s4 = inlined_call_operand.hbm [shape: f32[1,1,128], index: 4, kind: output, shape index: {}]
  %s5 = sld [smem:[#allocation0]]
  $region34: #{tpu_custom_call.1} parent=0
    _
  %s7 = ssub.s32 1, %s5
  %s8 = scalar_select 0, %s7, %s5
  $region1: #{tpu_custom_call.1} parent=0
    #allocation2 [shape = 'u8[2048]{0}', space=vmem, size = 0x800, scoped, tag = 'input window, operand 0, single buffered']
    #allocation3 [shape = 's32[1]{0}', space=sflag, size = 0x4, scoped, tag = 'scoped memory for tpu_custom_call.1']
    #allocation4 [shape = 's32[1]{0}', space=sflag, size = 0x4, scoped, tag = 'scoped memory for tpu_custom_call.1']
    #allocation5 [shape = 'u8[2048]{0}', space=vmem, size = 0x800, scoped, tag = 'input window, operand 1, single buffered']
    #allocation6 [shape = 's32[1]{0}', space=sflag, size = 0x4, scoped, tag = 'scoped memory for tpu_custom_call.1']
    #allocation7 [shape = 'u8[512]{0}', space=vmem, size = 0x400, scoped, tag = 'output window, operand 0, single buffered']
    %9 = vsyncpa [#allocation3], 0
    %10 = vsyncpa [#allocation6], 0
    %11 = vsyncpa [#allocation4], 0
    // Predicated region
    $region2: #{tpu_custom_call.1} parent=1 // pred_check
      _
    $region3: #{tpu_custom_call.1} parent=1 // pred_check_branch
      %13 = sbr.rel (0) target = $region5
    $region4: #{tpu_custom_call.1} parent=1 // pred_region
      %s15 = ssub.s32 64, 64
      %16 = vsyncadd [#allocation3], %s15
      %s18 = sshll.u32 [#allocation2], 4
      %s19 = int_to_ptr.vmem [resolvable:$true] %s18
      %21 = dma.hbm_to_vmem [thread:$0]  %s0, 64, %s19, [#allocation3]
    $region5: #{tpu_custom_call.1} parent=1 // pred_fallthru
      _
    // Predicated region
    $region6: #{tpu_custom_call.1} parent=1 // pred_check
      _
    $region7: #{tpu_custom_call.1} parent=1 // pred_check_branch
      %23 = sbr.rel (0) target = $region9
    $region8: #{tpu_custom_call.1} parent=1 // pred_region
      %s25 = ssub.s32 64, 64
      %26 = vsyncadd [#allocation6], %s25
      %s28 = sshll.u32 [#allocation5], 4
      %s29 = int_to_ptr.vmem [resolvable:$true] %s28
      %31 = dma.hbm_to_vmem [thread:$0]  %s1, 64, %s29, [#allocation6]
    $region9: #{tpu_custom_call.1} parent=1 // pred_fallthru
      _
    // Predicated region
    $region10: #{tpu_custom_call.1} parent=1 // pred_check
      _
    $region11: #{tpu_custom_call.1} parent=1 // pred_check_branch
      %33 = sbr.rel (0) target = $region13
    $region12: #{tpu_custom_call.1} parent=1 // pred_region
      _
    $region13: #{tpu_custom_call.1} parent=1 // pred_fallthru
      _
    // Predicated region
    $region14: #{tpu_custom_call.1} parent=1 // pred_check
      _
    $region15: #{tpu_custom_call.1} parent=1 // pred_check_branch
      %35 = sbr.rel (0) target = $region17
    $region16: #{tpu_custom_call.1} parent=1 // pred_region
      _
    $region17: #{tpu_custom_call.1} parent=1 // pred_fallthru
      _
    // Predicated region
    $region18: #{tpu_custom_call.1} parent=1 // pred_check
      _
    $region19: #{tpu_custom_call.1} parent=1 // pred_check_branch
      %37 = sbr.rel (0) target = $region21
    $region20: #{tpu_custom_call.1} parent=1 // pred_region
      %38 = dma.done [#allocation3], 64
    $region21: #{tpu_custom_call.1} parent=1 // pred_fallthru
      _
    // Predicated region
    $region22: #{tpu_custom_call.1} parent=1 // pred_check
      _
    $region23: #{tpu_custom_call.1} parent=1 // pred_check_branch
      %40 = sbr.rel (0) target = $region25
    $region24: #{tpu_custom_call.1} parent=1 // pred_region
      %41 = dma.done [#allocation6], 64
    $region25: #{tpu_custom_call.1} parent=1 // pred_fallthru
      _
    %v42 = vld [vmem:[#allocation2] sm:$0xf]
    %v43 = vld [vmem:[#allocation5] sm:$0xf]
    %v44 = vsub.f32 %v42, %v43
    %v45 = vmul.f32 %v44, %v44
    %v46 = vld [vmem:[%s2] sm:$0x3]
    %v47 = vld [vmem:[%s3] sm:$0x3]
    %v49 = vlaneseq
    %v50 = vshrl.u32 %v49, 7
    %v51 = vsub.s32 0, %v50
    %v52 = vrot.slane %v46, %v51
    %v53 = vlaneseq
    %v54 = vshrl.u32 %v53, 7
    %v55 = vsub.s32 1, %v54
    %v56 = vrot.slane %v46, %v55
    %v57 = vcombine.low %v52, %v56
    %v59 = vunpack.c.l.s4 1983009808
    %v60 = vunpack.c.0.s8 %v59
    %v61 = vlaneseq
    %v62 = vshrl.u32 %v61, 7
    %v63 = vsub.s32 %v60, %v62
    %v64 = vrot.slane %v57, %v63
    %v66 = vmul.f32 %v45, %v64
    %v69 = vunpack.c.l.s4 1983009808
    %v70 = vunpack.c.0.s8 %v69
    %v71 = vlaneseq
    %v72 = vshrl.u32 %v71, 7
    %v73 = vsub.s32 %v70, %v72
    %v74 = vrot.slane %v66, %v73
    %v75 = vcombine.high %v74, %v74
    %vm78 = vcmask 1041408
    %v79 = vsel %vm78, %v74, 0.0
    %v80 = vsel %vm78, %v75, 0.0
    %v81 = vadd.f32 %v79, %v80
    %82 = vadd.xlane.f32.xlu0 %v81
    %v83 = vpop.xlane.xlu0 %82
    %v84 = vrot.slane %v83, 4
    %v85 = vadd.f32 %v83, %v84
    %v86 = vrot.slane %v85, 2
    %v87 = vadd.f32 %v85, %v86
    %v88 = vrot.slane %v87, 1
    %v89 = vadd.f32 %v87, %v88
    %s90 = vtos %v89
    %s91 = smul.f32 %s90, 0.001953125
    %v93 = vlaneseq
    %v94 = vshrl.u32 %v93, 7
    %v95 = vsub.s32 0, %v94
    %v96 = vrot.slane %v47, %v95
    %v97 = vlaneseq
    %v98 = vshrl.u32 %v97, 7
    %v99 = vsub.s32 1, %v98
    %v100 = vrot.slane %v47, %v99
    %v101 = vcombine.low %v96, %v100
    %v103 = vunpack.c.l.s4 1983009808
    %v104 = vunpack.c.0.s8 %v103
    %v105 = vlaneseq
    %v106 = vshrl.u32 %v105, 7
    %v107 = vsub.s32 %v104, %v106
    %v108 = vrot.slane %v101, %v107
    %v110 = vmul.f32 %v45, %v108
    %v113 = vunpack.c.l.s4 1983009808
    %v114 = vunpack.c.0.s8 %v113
    %v115 = vlaneseq
    %v116 = vshrl.u32 %v115, 7
    %v117 = vsub.s32 %v114, %v116
    %v118 = vrot.slane %v110, %v117
    %v119 = vcombine.high %v118, %v118
    %v122 = vsel %vm78, %v118, 0.0
    %v123 = vsel %vm78, %v119, 0.0
    %v124 = vadd.f32 %v122, %v123
    %125 = vadd.xlane.f32.xlu0 %v124
    %v126 = vpop.xlane.xlu0 %125
    %v127 = vrot.slane %v126, 4
    %v128 = vadd.f32 %v126, %v127
    %v129 = vrot.slane %v128, 2
    %v130 = vadd.f32 %v128, %v129
    %v131 = vrot.slane %v130, 1
    %v132 = vadd.f32 %v130, %v131
    %s133 = vtos %v132
    %s134 = smul.f32 %s133, 0.125
    %v135 = vlaneseq
    %v136 = vand.u32 %v135, 127
    %vm137 = vcmp.eq.s32.totalorder %v136, 0
    %vm138 = vcmp.eq.s32.totalorder %v136, 1
    %v139 = vstv %s134
    %v140 = vsel %vm138, %v139, 0.0
    %v141 = vstv %s91
    %v142 = vsel %vm137, %v141, %v140
    %143 = vst [vmem:[#allocation7] sm:$0x1] %v142
    // Predicated region
    $region26: #{tpu_custom_call.1} parent=1 // pred_check
      _
    $region27: #{tpu_custom_call.1} parent=1 // pred_check_branch
      %145 = sbr.rel (0) target = $region29
    $region28: #{tpu_custom_call.1} parent=1 // pred_region
      %s147 = ssub.s32 16, 16
      %148 = vsyncadd [#allocation4], %s147
      %s150 = sshll.u32 [#allocation7], 4
      %s151 = int_to_ptr.vmem [resolvable:$true] %s150
      %153 = dma.vmem_to_hbm [thread:$0]  %s151, 16, %s4, [#allocation4]
    $region29: #{tpu_custom_call.1} parent=1 // pred_fallthru
      _
    // Predicated region
    $region30: #{tpu_custom_call.1} parent=1 // pred_check
      _
    $region31: #{tpu_custom_call.1} parent=1 // pred_check_branch
      %155 = sbr.rel (0) target = $region33
    $region32: #{tpu_custom_call.1} parent=1 // pred_region
      %156 = dma.done [#allocation4], 16
    $region33: #{tpu_custom_call.1} parent=1 // pred_fallthru
      _
    %157 = vsyncpa [#allocation3], 1
    %158 = vsyncpa [#allocation6], 1
    %159 = vsyncpa [#allocation4], 1

</llo_original>
